<compile_context>
chip_gen: v7x
topology: tpu7x:2x2x1
jax: 0.10.0
libtpu: 0.0.40
codegen_flags: <defaults>
</compile_context>

<pallas_src>
import math

import jax
import jax.numpy as jnp
import numpy as np
from jax.experimental import pallas as pl
from jax.experimental.pallas import tpu as pltpu


def _lora_conv_folded_kernel(x_ref, wc_ref, wl_ref, bias_ref, o_ref):
    """conv = ReLU(x @ Wc^T + b); lora = x @ (A^T B^T); out = conv + lora.

    x_ref   : (TM, Dp)   tile of flattened input rows (padded D)
    wc_ref  : (Dp, Np)   conv1x1 weight, pre-transposed + padded
    wl_ref  : (Dp, Np)   folded LoRA weight (A.T @ B.T), padded
    bias_ref: (1,  Np)   conv bias, padded
    o_ref   : (TM, Np)   output tile
    """
    x = x_ref[...]
    conv = jnp.dot(x, wc_ref[...], preferred_element_type=jnp.float32)
    conv = jnp.maximum(conv + bias_ref[...].astype(jnp.float32), 0.0)
    lora = jnp.dot(x, wl_ref[...], preferred_element_type=jnp.float32)
    o_ref[...] = (conv + lora).astype(o_ref.dtype)


def _lora_conv_rank_kernel(x_ref, at_ref, bt_ref, wc_ref, bias_ref, o_ref):
    """Explicit rank-r LoRA path (fallback when folding the weight is too big).

    x_ref   : (TM, Dp)
    at_ref  : (Dp, r)    lora_A.T (padded along D)
    bt_ref  : (r,  Np)   lora_B.T (padded along out)
    wc_ref  : (Dp, Np)   conv1x1 weight, pre-transposed + padded
    bias_ref: (1,  Np)
    o_ref   : (TM, Np)
    """
    x = x_ref[...]
    mid = jnp.dot(x, at_ref[...], preferred_element_type=jnp.float32)
    lora = jnp.dot(mid.astype(bt_ref.dtype), bt_ref[...],
                   preferred_element_type=jnp.float32)
    conv = jnp.dot(x, wc_ref[...], preferred_element_type=jnp.float32)
    conv = jnp.maximum(conv + bias_ref[...].astype(jnp.float32), 0.0)
    o_ref[...] = (conv + lora).astype(o_ref.dtype)


def _round_up(x, m):
    return (x + m - 1) // m * m


def custom_lora_layer(x, lora_A, lora_B, conv_w, conv_b, *, tm=512,
                      fold_lora=None):
    """x: (B, L, D_in) -> (B, L, out_features)."""
    B, L, D_in = x.shape
    out_features, r = lora_B.shape
    M = B * L

    if fold_lora is None:
        # Fold rank-r into a dense (D_in, out) weight when it stays modest.
        fold_lora = (D_in * out_features * x.dtype.itemsize) <= (16 << 20)

    # Lane-dense padding of feature dims; row padding to a tile multiple.
    d_pad = _round_up(D_in, 128)
    n_pad = _round_up(out_features, 128)
    tm_eff = min(tm, _round_up(M, 8))
    m_pad = _round_up(M, tm_eff)

    x2d = x.reshape(M, D_in)
    if (m_pad, d_pad) != (M, D_in):
        x2d = jnp.pad(x2d, ((0, m_pad - M), (0, d_pad - D_in)))

    # Pre-transpose + pad weights once on the XLA side (no per-step XLU work).
    wc_t = jnp.pad(conv_w.reshape(out_features, D_in).T,
                   ((0, d_pad - D_in), (0, n_pad - out_features)))
    bias2d = jnp.pad(conv_b.reshape(1, out_features),
                     ((0, 0), (0, n_pad - out_features)))

    grid = (m_pad // tm_eff,)
    x_spec = pl.BlockSpec((tm_eff, d_pad), lambda i: (i, 0))
    o_spec = pl.BlockSpec((tm_eff, n_pad), lambda i: (i, 0))
    out_shape = jax.ShapeDtypeStruct((m_pad, n_pad), x.dtype)
    cparams = pltpu.CompilerParams(
        dimension_semantics=("parallel",),
        vmem_limit_bytes=64 * 1024 * 1024,
    )

    if fold_lora:
        w_lora = jnp.pad(lora_A.T @ lora_B.T,
                         ((0, d_pad - D_in), (0, n_pad - out_features)))
        out2d = pl.pallas_call(
            _lora_conv_folded_kernel,
            out_shape=out_shape,
            grid_spec=pltpu.PrefetchScalarGridSpec(
                num_scalar_prefetch=0,
                grid=grid,
                in_specs=[
                    x_spec,                                        # x rows
                    pl.BlockSpec((d_pad, n_pad), lambda i: (0, 0)),  # Wc^T
                    pl.BlockSpec((d_pad, n_pad), lambda i: (0, 0)),  # W_lora
                    pl.BlockSpec((1, n_pad), lambda i: (0, 0)),      # bias
                ],
                out_specs=o_spec,
            ),
            compiler_params=cparams,
        )(x2d, wc_t, w_lora, bias2d)
    else:
        a_t = jnp.pad(lora_A.T, ((0, d_pad - D_in), (0, 0)))            # (Dp, r)
        b_t = jnp.pad(lora_B.T, ((0, 0), (0, n_pad - out_features)))    # (r, Np)
        out2d = pl.pallas_call(
            _lora_conv_rank_kernel,
            out_shape=out_shape,
            grid_spec=pltpu.PrefetchScalarGridSpec(
                num_scalar_prefetch=0,
                grid=grid,
                in_specs=[
                    x_spec,                                          # x rows
                    pl.BlockSpec((d_pad, r), lambda i: (0, 0)),      # A^T
                    pl.BlockSpec((r, n_pad), lambda i: (0, 0)),      # B^T
                    pl.BlockSpec((d_pad, n_pad), lambda i: (0, 0)),  # Wc^T
                    pl.BlockSpec((1, n_pad), lambda i: (0, 0)),      # bias
                ],
                out_specs=o_spec,
            ),
            compiler_params=cparams,
        )(x2d, a_t, b_t, wc_t, bias2d)

    return out2d[:M, :out_features].reshape(B, L, out_features)


def _reference(x, lora_A, lora_B, conv_w, conv_b):
    """Plain-JAX reference mirroring the PyTorch forward."""
    lora_out = x @ lora_A.T @ lora_B.T
    conv = jnp.einsum("bld,od->blo", x, conv_w.reshape(conv_w.shape[0], -1))
    conv = jnp.maximum(conv + conv_b[None, None, :], 0.0)
    return conv + lora_out


if __name__ == "__main__":
    # Small shapes consistent with the module: (batch, seq, hidden)
    B, L = 2, 8
    in_features, out_features, r = 32, 32, 8

    key = jax.random.PRNGKey(0)
    kx, ka, kb, kw, kbias = jax.random.split(key, 5)

    x = jax.random.normal(kx, (B, L, in_features), dtype=jnp.float32)

    # lora_A: kaiming_uniform_(a=sqrt(5)) -> U(-1/sqrt(in), 1/sqrt(in))
    bound_a = 1.0 / math.sqrt(in_features)
    lora_A = jax.random.uniform(ka, (r, in_features), jnp.float32,
                                -bound_a, bound_a)
    # Module inits lora_B to zeros; use small random values so the LoRA path
    # is actually exercised (shapes/semantics unchanged).
    lora_B = 0.1 * jax.random.normal(kb, (out_features, r), dtype=jnp.float32)

    # Conv1d(in, out, kernel_size=1) default init: U(-1/sqrt(fan_in), ...)
    bound_c = 1.0 / math.sqrt(in_features)
    conv_w = jax.random.uniform(kw, (out_features, in_features, 1), jnp.float32,
                                -bound_c, bound_c)
    conv_b = jax.random.uniform(kbias, (out_features,), jnp.float32,
                                -bound_c, bound_c)

    ref = _reference(x, lora_A, lora_B, conv_w, conv_b)

    # Folded-LoRA path (default for small/medium weights).
    out_folded = custom_lora_layer(x, lora_A, lora_B, conv_w, conv_b)
    out_folded = jax.block_until_ready(out_folded)
    np.testing.assert_allclose(np.asarray(out_folded), np.asarray(ref),
                               rtol=1e-4, atol=1e-4)

    # Explicit rank-r path (fallback for very large D_in * out_features).
    out_rank = custom_lora_layer(x, lora_A, lora_B, conv_w, conv_b,
                                 fold_lora=False)
    out_rank = jax.block_until_ready(out_rank)
    np.testing.assert_allclose(np.asarray(out_rank), np.asarray(ref),
                               rtol=1e-4, atol=1e-4)

    print("KERNEL_OK")
</pallas_src>

<mosaic_0001>
module attributes {stable_mosaic.version = 11 : i64} {
  func.func @_lora_conv_folded_kernel(%arg0: i32, %arg1: memref<16x128xf32, #tpu.memory_space<vmem>>, %arg2: memref<128x128xf32, #tpu.memory_space<vmem>>, %arg3: memref<128x128xf32, #tpu.memory_space<vmem>>, %arg4: memref<1x128xf32, #tpu.memory_space<vmem>>, %arg5: memref<16x128xf32, #tpu.memory_space<vmem>>) attributes {dimension_semantics = [#tpu.dimension_semantics<parallel>], iteration_bounds = array<i64: 1>, scalar_prefetch = 0 : i64, scratch_operands = 0 : i64, tpu.core_type = #tpu.core_type<tc>, window_params = [{transform_indices = @transform_0, window_bounds = array<i64: 16, 128>}, {pipeline_mode = #tpu.pipeline_mode<synchronous>, transform_indices = @transform_1, window_bounds = array<i64: 128, 128>}, {pipeline_mode = #tpu.pipeline_mode<synchronous>, transform_indices = @transform_2, window_bounds = array<i64: 128, 128>}, {pipeline_mode = #tpu.pipeline_mode<synchronous>, transform_indices = @transform_3, window_bounds = array<i64: 1, 128>}, {transform_indices = @transform_4, window_bounds = array<i64: 16, 128>}]} {
    %c0 = arith.constant 0 : index
    %c0_0 = arith.constant 0 : index
    %0 = vector.load %arg1[%c0, %c0_0] : memref<16x128xf32, #tpu.memory_space<vmem>>, vector<16x128xf32>
    %c0_1 = arith.constant 0 : index
    %c0_2 = arith.constant 0 : index
    %1 = vector.load %arg2[%c0_1, %c0_2] : memref<128x128xf32, #tpu.memory_space<vmem>>, vector<128x128xf32>
    %cst = arith.constant dense<0.000000e+00> : vector<16x128xf32>
    %2 = tpu.matmul %0, %1, %cst {dimension_numbers = #tpu.dot_dimension_numbers<[1], [0], [0], [1], [0, 0, 1, 1], [], []>} : vector<16x128xf32>, vector<128x128xf32>, vector<16x128xf32> -> vector<16x128xf32>
    %c0_3 = arith.constant 0 : index
    %c0_4 = arith.constant 0 : index
    %3 = vector.load %arg4[%c0_3, %c0_4] : memref<1x128xf32, #tpu.memory_space<vmem>>, vector<1x128xf32>
    %4 = vector.broadcast %3 : vector<1x128xf32> to vector<16x128xf32>
    %5 = arith.addf %2, %4 : vector<16x128xf32>
    %cst_5 = arith.constant 0.000000e+00 : f32
    %6 = vector.broadcast %cst_5 : f32 to vector<16x128xf32>
    %7 = arith.maximumf %5, %6 : vector<16x128xf32>
    %c0_6 = arith.constant 0 : index
    %c0_7 = arith.constant 0 : index
    %8 = vector.load %arg3[%c0_6, %c0_7] : memref<128x128xf32, #tpu.memory_space<vmem>>, vector<128x128xf32>
    %cst_8 = arith.constant dense<0.000000e+00> : vector<16x128xf32>
    %9 = tpu.matmul %0, %8, %cst_8 {dimension_numbers = #tpu.dot_dimension_numbers<[1], [0], [0], [1], [0, 0, 1, 1], [], []>} : vector<16x128xf32>, vector<128x128xf32>, vector<16x128xf32> -> vector<16x128xf32>
    %10 = arith.addf %7, %9 : vector<16x128xf32>
    %c0_9 = arith.constant 0 : index
    %c0_10 = arith.constant 0 : index
    %11 = vector.load %arg5[%c0_9, %c0_10] : memref<16x128xf32, #tpu.memory_space<vmem>>, vector<16x128xf32>
    tpu.vector_store %arg5[%c0_9, %c0_10], %10 {strides = array<i32>} : memref<16x128xf32, #tpu.memory_space<vmem>>, vector<16x128xf32>,
    return
  }
  func.func @transform_0(%arg0: i32) -> (i32, i32) {
    %c0_i32 = arith.constant 0 : i32
    %c0_i32_0 = arith.constant 0 : i32
    return %arg0, %c0_i32 : i32, i32
  }
  func.func @transform_1(%arg0: i32) -> (i32, i32) {
    %c0_i32 = arith.constant 0 : i32
    %c0_i32_0 = arith.constant 0 : i32
    %c0_i32_1 = arith.constant 0 : i32
    return %c0_i32, %c0_i32_0 : i32, i32
  }
  func.func @transform_2(%arg0: i32) -> (i32, i32) {
    %c0_i32 = arith.constant 0 : i32
    %c0_i32_0 = arith.constant 0 : i32
    %c0_i32_1 = arith.constant 0 : i32
    return %c0_i32, %c0_i32_0 : i32, i32
  }
  func.func @transform_3(%arg0: i32) -> (i32, i32) {
    %c0_i32 = arith.constant 0 : i32
    %c0_i32_0 = arith.constant 0 : i32
    %c0_i32_1 = arith.constant 0 : i32
    return %c0_i32, %c0_i32_0 : i32, i32
  }
  func.func @transform_4(%arg0: i32) -> (i32, i32) {
    %c0_i32 = arith.constant 0 : i32
    %c0_i32_0 = arith.constant 0 : i32
    return %arg0, %c0_i32 : i32, i32
  }
}

</mosaic_0001>

<llo_original>
// kernel: tpu_custom_call.1
$region0: #{tpu_custom_call.1}
  #allocation0 [shape = 'u32[]', space=smem, size = 0x4, offset = 0x4, fixed_abs, tag = 'smem constant byte address 0x4 - core index']
  #allocation1 [shape = 'u32[144,128]{1,0:T(1,128)}', space=vmem, size = 0x12000, scoped, tag = 'internal scratch']
  %s0 = inlined_call_operand.hbm [shape: f32[16,128], index: 0, kind: input, shape index: {}]
  %s1 = inlined_call_operand.hbm [shape: f32[128,128], index: 1, kind: input, shape index: {}]
  %s2 = inlined_call_operand.hbm [shape: f32[128,128], index: 2, kind: input, shape index: {}]
  %s3 = inlined_call_operand.hbm [shape: f32[1,128], index: 3, kind: input, shape index: {}]
  %s4 = inlined_call_operand.hbm [shape: f32[16,128], index: 4, kind: output, shape index: {}]
  %s5 = sld [smem:[#allocation0]]
  $region42: #{tpu_custom_call.1} parent=0
    _
  %s7 = ssub.s32 1, %s5
  %s8 = scalar_select 0, %s7, %s5
  $region1: #{tpu_custom_call.1} parent=0
    #allocation2 [shape = 'u8[8192]{0}', space=vmem, size = 0x2000, scoped, tag = 'input window, operand 0, single buffered']
    #allocation3 [shape = 's32[1]{0}', space=sflag, size = 0x4, scoped, tag = 'scoped memory for tpu_custom_call.1']
    #allocation4 [shape = 's32[1]{0}', space=sflag, size = 0x4, scoped, tag = 'scoped memory for tpu_custom_call.1']
    #allocation5 [shape = 'u8[65536]{0}', space=vmem, size = 0x10000, scoped, tag = 'input window, operand 1, single buffered']
    #allocation6 [shape = 's32[1]{0}', space=sflag, size = 0x4, scoped, tag = 'scoped memory for tpu_custom_call.1']
    #allocation7 [shape = 'u8[65536]{0}', space=vmem, size = 0x10000, scoped, tag = 'input window, operand 2, single buffered']
    #allocation8 [shape = 'u8[512]{0}', space=vmem, size = 0x400, scoped, tag = 'input window, operand 3, single buffered']
    #allocation9 [shape = 's32[1]{0}', space=sflag, size = 0x4, scoped, tag = 'scoped memory for tpu_custom_call.1']
    #allocation10 [shape = 'u8[8192]{0}', space=vmem, size = 0x2000, scoped, tag = 'output window, operand 0, single buffered']
    %9 = vsyncpa [#allocation3], 0
    %10 = vsyncpa [#allocation6], 0
    %11 = vsyncpa [#allocation9], 0
    %12 = vsyncpa [#allocation4], 0
    // Predicated region
    $region2: #{tpu_custom_call.1} parent=1 // pred_check
      _
    $region3: #{tpu_custom_call.1} parent=1 // pred_check_branch
      %14 = sbr.rel (0) target = $region5
    $region4: #{tpu_custom_call.1} parent=1 // pred_region
      %s16 = ssub.s32 256, 256
      %17 = vsyncadd [#allocation3], %s16
      %s18 = sshll.u32 [#allocation2], 4
      %s19 = int_to_ptr.vmem [resolvable:$true] %s18
      %24 = dma.hbm_to_vmem [thread:$0]  %s0, 256, %s19, [#allocation3], 128, 128, 8
    $region5: #{tpu_custom_call.1} parent=1 // pred_fallthru
      _
    // Predicated region
    $region6: #{tpu_custom_call.1} parent=1 // pred_check
      _
    $region7: #{tpu_custom_call.1} parent=1 // pred_check_branch
      %26 = sbr.rel (0) target = $region9
    $region8: #{tpu_custom_call.1} parent=1 // pred_region
      %s28 = ssub.s32 2048, 2048
      %29 = vsyncadd [#allocation6], %s28
      %s30 = sshll.u32 [#allocation5], 4
      %s31 = int_to_ptr.vmem [resolvable:$true] %s30
      %36 = dma.hbm_to_vmem [thread:$0]  %s1, 2048, %s31, [#allocation6], 128, 128, 8
    $region9: #{tpu_custom_call.1} parent=1 // pred_fallthru
      _
    // Predicated region
    $region10: #{tpu_custom_call.1} parent=1 // pred_check
      _
    $region11: #{tpu_custom_call.1} parent=1 // pred_check_branch
      %38 = sbr.rel (0) target = $region13
    $region12: #{tpu_custom_call.1} parent=1 // pred_region
      %s40 = ssub.s32 2048, 2048
      %41 = vsyncadd [#allocation6], %s40
      %s42 = sshll.u32 [#allocation7], 4
      %s43 = int_to_ptr.vmem [resolvable:$true] %s42
      %48 = dma.hbm_to_vmem [thread:$0]  %s2, 2048, %s43, [#allocation6], 128, 128, 8
    $region13: #{tpu_custom_call.1} parent=1 // pred_fallthru
      _
    // Predicated region
    $region14: #{tpu_custom_call.1} parent=1 // pred_check
      _
    $region15: #{tpu_custom_call.1} parent=1 // pred_check_branch
      %50 = sbr.rel (0) target = $region17
    $region16: #{tpu_custom_call.1} parent=1 // pred_region
      %s52 = ssub.s32 16, 16
      %53 = vsyncadd [#allocation9], %s52
      %s55 = sshll.u32 [#allocation8], 4
      %s56 = int_to_ptr.vmem [resolvable:$true] %s55
      %58 = dma.hbm_to_vmem [thread:$0]  %s3, 16, %s56, [#allocation9]
    $region17: #{tpu_custom_call.1} parent=1 // pred_fallthru
      _
    // Predicated region
    $region18: #{tpu_custom_call.1} parent=1 // pred_check
      _
    $region19: #{tpu_custom_call.1} parent=1 // pred_check_branch
      %60 = sbr.rel (0) target = $region21
    $region20: #{tpu_custom_call.1} parent=1 // pred_region
      %61 = dma.done [#allocation3], 256
    $region21: #{tpu_custom_call.1} parent=1 // pred_fallthru
      _
    // Predicated region
    $region22: #{tpu_custom_call.1} parent=1 // pred_check
      _
    $region23: #{tpu_custom_call.1} parent=1 // pred_check_branch
      %63 = sbr.rel (0) target = $region25
    $region24: #{tpu_custom_call.1} parent=1 // pred_region
      %64 = dma.done [#allocation6], 2048
    $region25: #{tpu_custom_call.1} parent=1 // pred_fallthru
      _
    // Predicated region
    $region26: #{tpu_custom_call.1} parent=1 // pred_check
      _
    $region27: #{tpu_custom_call.1} parent=1 // pred_check_branch
      %66 = sbr.rel (0) target = $region29
    $region28: #{tpu_custom_call.1} parent=1 // pred_region
      %67 = dma.done [#allocation6], 2048
    $region29: #{tpu_custom_call.1} parent=1 // pred_fallthru
      _
    // Predicated region
    $region30: #{tpu_custom_call.1} parent=1 // pred_check
      _
    $region31: #{tpu_custom_call.1} parent=1 // pred_check_branch
      %69 = sbr.rel (0) target = $region33
    $region32: #{tpu_custom_call.1} parent=1 // pred_region
      %70 = dma.done [#allocation9], 16
    $region33: #{tpu_custom_call.1} parent=1 // pred_fallthru
      _
    %v71 = vld [vmem:[#allocation2] sm:$0xff]
    %v72 = vld [vmem:[#allocation2 + $0x8] sm:$0xff]
    %v73 = vld [vmem:[#allocation5] sm:$0xff]
    %v74 = vld [vmem:[#allocation5 + $0x8] sm:$0xff]
    %v75 = vld [vmem:[#allocation5 + $0x10] sm:$0xff]
    %v76 = vld [vmem:[#allocation5 + $0x18] sm:$0xff]
    %v77 = vld [vmem:[#allocation5 + $0x20] sm:$0xff]
    %v78 = vld [vmem:[#allocation5 + $0x28] sm:$0xff]
    %v79 = vld [vmem:[#allocation5 + $0x30] sm:$0xff]
    %v80 = vld [vmem:[#allocation5 + $0x38] sm:$0xff]
    %v81 = vld [vmem:[#allocation5 + $0x40] sm:$0xff]
    %v82 = vld [vmem:[#allocation5 + $0x48] sm:$0xff]
    %v83 = vld [vmem:[#allocation5 + $0x50] sm:$0xff]
    %v84 = vld [vmem:[#allocation5 + $0x58] sm:$0xff]
    %v85 = vld [vmem:[#allocation5 + $0x60] sm:$0xff]
    %v86 = vld [vmem:[#allocation5 + $0x68] sm:$0xff]
    %v87 = vld [vmem:[#allocation5 + $0x70] sm:$0xff]
    %v88 = vld [vmem:[#allocation5 + $0x78] sm:$0xff]
    %v89 = vld [vmem:[#allocation8] sm:$0x1]
    %v91 = vlaneseq
    %v92 = vshrl.u32 %v91, 7
    %v93 = vsub.s32 0, %v92
    %v94 = vrot.slane %v89, %v93
    %96 = vmatprep.subr.mxu0 0.0
    %97 = vmatpush1.msra.mxu0 %v73
    %98 = vmatprep.subr.mxu0 0.0
    %99 = vmatpush1.msra.mxu0 %v74
    %100 = vmatprep.subr.mxu0 0.0
    %101 = vmatpush1.msra.mxu0 %v75
    %102 = vmatprep.subr.mxu0 0.0
    %103 = vmatpush1.msra.mxu0 %v76
    %104 = vmatprep.subr.mxu0 0.0
    %105 = vmatpush1.msra.mxu0 %v77
    %106 = vmatprep.subr.mxu0 0.0
    %107 = vmatpush1.msra.mxu0 %v78
    %108 = vmatprep.subr.mxu0 0.0
    %109 = vmatpush1.msra.mxu0 %v79
    %110 = vmatprep.subr.mxu0 0.0
    %111 = vmatpush1.msra.mxu0 %v80
    %112 = vmatprep.subr.mxu0 0.0
    %113 = vmatpush1.msra.mxu0 %v81
    %114 = vmatprep.subr.mxu0 0.0
    %115 = vmatpush1.msra.mxu0 %v82
    %116 = vmatprep.subr.mxu0 0.0
    %117 = vmatpush1.msra.mxu0 %v83
    %118 = vmatprep.subr.mxu0 0.0
    %119 = vmatpush1.msra.mxu0 %v84
    %120 = vmatprep.subr.mxu0 0.0
    %121 = vmatpush1.msra.mxu0 %v85
    %122 = vmatprep.subr.mxu0 0.0
    %123 = vmatpush1.msra.mxu0 %v86
    %124 = vmatprep.subr.mxu0 0.0
    %125 = vmatpush1.msra.mxu0 %v87
    %126 = vmatprep.subr.mxu0 0.0
    %127 = vmatpush1.msra.mxu0 %v88
    %128 = vmatprep.subr.mxu0 0.0
    %129 = vmatpush1.msra.mxu0 0.0
    %130 = vmatprep.subr.mxu0 0.0
    %131 = vmatpush1.msra.mxu0 0.0
    %132 = vmatprep.subr.mxu0 0.0
    %133 = vmatpush1.msra.mxu0 0.0
    %134 = vmatprep.subr.mxu0 0.0
    %135 = vmatpush1.msra.mxu0 0.0
    %136 = vmatprep.subr.mxu0 0.0
    %137 = vmatpush1.msra.mxu0 0.0
    %138 = vmatprep.subr.mxu0 0.0
    %139 = vmatpush1.msra.mxu0 0.0
    %140 = vmatprep.subr.mxu0 0.0
    %141 = vmatpush1.msra.mxu0 0.0
    %142 = vmatprep.subr.mxu0 0.0
    %143 = vmatpush1.msra.mxu0 0.0
    %144 = vmatprep.subr.mxu0 0.0
    %145 = vmatpush1.msra.mxu0 0.0
    %146 = vmatprep.subr.mxu0 0.0
    %147 = vmatpush1.msra.mxu0 0.0
    %148 = vmatprep.subr.mxu0 0.0
    %149 = vmatpush1.msra.mxu0 0.0
    %150 = vmatprep.subr.mxu0 0.0
    %151 = vmatpush1.msra.mxu0 0.0
    %152 = vmatprep.subr.mxu0 0.0
    %153 = vmatpush1.msra.mxu0 0.0
    %154 = vmatprep.subr.mxu0 0.0
    %155 = vmatpush1.msra.mxu0 0.0
    %156 = vmatprep.subr.mxu0 0.0
    %157 = vmatpush1.msra.mxu0 0.0
    %158 = vmatprep.subr.mxu0 0.0
    %159 = vmatpush1.msra.mxu0 0.0
    %160 = vmatprep.mubr.f32.mxu0 0.0
    %161 = vmatmul.mubr.f32.gmra.mrb[0].mxu0 %v71
    %v162 = vpop.f32.mrb[0].mxu0
    %v163 = vadd.f32 %v94, %v162
    %v164 = vpop.f32.mrb[0].mxu0
    %165 = vmatprep.mubr.f32.mxu0 0.0
    %166 = vmatmul.mubr.f32.gmra.mrb[0].mxu0 %v72
    %v167 = vpop.f32.mrb[0].mxu0
    %v168 = vadd.f32 %v94, %v167
    %v169 = vpop.f32.mrb[0].mxu0
    %170 = vdwg.mxu0
    %v171 = vmax.f32 %v163, 0.0
    %v172 = vmax.f32 %v168, 0.0
    %v173 = vld [vmem:[#allocation7] sm:$0xff]
    %v174 = vld [vmem:[#allocation7 + $0x8] sm:$0xff]
    %v175 = vld [vmem:[#allocation7 + $0x10] sm:$0xff]
    %v176 = vld [vmem:[#allocation7 + $0x18] sm:$0xff]
    %v177 = vld [vmem:[#allocation7 + $0x20] sm:$0xff]
    %v178 = vld [vmem:[#allocation7 + $0x28] sm:$0xff]
    %v179 = vld [vmem:[#allocation7 + $0x30] sm:$0xff]
    %v180 = vld [vmem:[#allocation7 + $0x38] sm:$0xff]
    %v181 = vld [vmem:[#allocation7 + $0x40] sm:$0xff]
    %v182 = vld [vmem:[#allocation7 + $0x48] sm:$0xff]
    %v183 = vld [vmem:[#allocation7 + $0x50] sm:$0xff]
    %v184 = vld [vmem:[#allocation7 + $0x58] sm:$0xff]
    %v185 = vld [vmem:[#allocation7 + $0x60] sm:$0xff]
    %v186 = vld [vmem:[#allocation7 + $0x68] sm:$0xff]
    %v187 = vld [vmem:[#allocation7 + $0x70] sm:$0xff]
    %v188 = vld [vmem:[#allocation7 + $0x78] sm:$0xff]
    %189 = vmatprep.subr.mxu0 0.0
    %190 = vmatpush1.msra.mxu0 %v173
    %191 = vmatprep.subr.mxu0 0.0
    %192 = vmatpush1.msra.mxu0 %v174
    %193 = vmatprep.subr.mxu0 0.0
    %194 = vmatpush1.msra.mxu0 %v175
    %195 = vmatprep.subr.mxu0 0.0
    %196 = vmatpush1.msra.mxu0 %v176
    %197 = vmatprep.subr.mxu0 0.0
    %198 = vmatpush1.msra.mxu0 %v177
    %199 = vmatprep.subr.mxu0 0.0
    %200 = vmatpush1.msra.mxu0 %v178
    %201 = vmatprep.subr.mxu0 0.0
    %202 = vmatpush1.msra.mxu0 %v179
    %203 = vmatprep.subr.mxu0 0.0
    %204 = vmatpush1.msra.mxu0 %v180
    %205 = vmatprep.subr.mxu0 0.0
    %206 = vmatpush1.msra.mxu0 %v181
    %207 = vmatprep.subr.mxu0 0.0
    %208 = vmatpush1.msra.mxu0 %v182
    %209 = vmatprep.subr.mxu0 0.0
    %210 = vmatpush1.msra.mxu0 %v183
    %211 = vmatprep.subr.mxu0 0.0
    %212 = vmatpush1.msra.mxu0 %v184
    %213 = vmatprep.subr.mxu0 0.0
    %214 = vmatpush1.msra.mxu0 %v185
    %215 = vmatprep.subr.mxu0 0.0
    %216 = vmatpush1.msra.mxu0 %v186
    %217 = vmatprep.subr.mxu0 0.0
    %218 = vmatpush1.msra.mxu0 %v187
    %219 = vmatprep.subr.mxu0 0.0
    %220 = vmatpush1.msra.mxu0 %v188
    %221 = vmatprep.subr.mxu0 0.0
    %222 = vmatpush1.msra.mxu0 0.0
    %223 = vmatprep.subr.mxu0 0.0
    %224 = vmatpush1.msra.mxu0 0.0
    %225 = vmatprep.subr.mxu0 0.0
    %226 = vmatpush1.msra.mxu0 0.0
    %227 = vmatprep.subr.mxu0 0.0
    %228 = vmatpush1.msra.mxu0 0.0
    %229 = vmatprep.subr.mxu0 0.0
    %230 = vmatpush1.msra.mxu0 0.0
    %231 = vmatprep.subr.mxu0 0.0
    %232 = vmatpush1.msra.mxu0 0.0
    %233 = vmatprep.subr.mxu0 0.0
    %234 = vmatpush1.msra.mxu0 0.0
    %235 = vmatprep.subr.mxu0 0.0
    %236 = vmatpush1.msra.mxu0 0.0
    %237 = vmatprep.subr.mxu0 0.0
    %238 = vmatpush1.msra.mxu0 0.0
    %239 = vmatprep.subr.mxu0 0.0
    %240 = vmatpush1.msra.mxu0 0.0
    %241 = vmatprep.subr.mxu0 0.0
    %242 = vmatpush1.msra.mxu0 0.0
    %243 = vmatprep.subr.mxu0 0.0
    %244 = vmatpush1.msra.mxu0 0.0
    %245 = vmatprep.subr.mxu0 0.0
    %246 = vmatpush1.msra.mxu0 0.0
    %247 = vmatprep.subr.mxu0 0.0
    %248 = vmatpush1.msra.mxu0 0.0
    %249 = vmatprep.subr.mxu0 0.0
    %250 = vmatpush1.msra.mxu0 0.0
    %251 = vmatprep.subr.mxu0 0.0
    %252 = vmatpush1.msra.mxu0 0.0
    %253 = vmatprep.mubr.f32.mxu0 0.0
    %254 = vmatmul.mubr.f32.gmra.mrb[0].mxu0 %v71
    %v255 = vpop.f32.mrb[0].mxu0
    %v256 = vadd.f32 0.0, %v255
    %v257 = vpop.f32.mrb[0].mxu0
    %258 = vmatprep.mubr.f32.mxu0 0.0
    %259 = vmatmul.mubr.f32.gmra.mrb[0].mxu0 %v72
    %v260 = vpop.f32.mrb[0].mxu0
    %v261 = vadd.f32 0.0, %v260
    %v262 = vpop.f32.mrb[0].mxu0
    %263 = vdwg.mxu0
    %v264 = vadd.f32 %v171, %v256
    %v265 = vadd.f32 %v172, %v261
    %266 = vst [vmem:[#allocation10] sm:$0xff] %v264
    %267 = vst [vmem:[#allocation10 + $0x8] sm:$0xff] %v265
    // Predicated region
    $region34: #{tpu_custom_call.1} parent=1 // pred_check
      _
    $region35: #{tpu_custom_call.1} parent=1 // pred_check_branch
      %269 = sbr.rel (0) target = $region37
    $region36: #{tpu_custom_call.1} parent=1 // pred_region
      %s271 = ssub.s32 256, 256
      %272 = vsyncadd [#allocation4], %s271
      %s273 = sshll.u32 [#allocation10], 4
      %s274 = int_to_ptr.vmem [resolvable:$true] %s273
      %279 = dma.vmem_to_hbm [thread:$0]  %s274, 256, %s4, [#allocation4], 128, 128, 8
    $region37: #{tpu_custom_call.1} parent=1 // pred_fallthru
      _
    // Predicated region
    $region38: #{tpu_custom_call.1} parent=1 // pred_check
      _
    $region39: #{tpu_custom_call.1} parent=1 // pred_check_branch
      %281 = sbr.rel (0) target = $region41
    $region40: #{tpu_custom_call.1} parent=1 // pred_region
      %282 = dma.done [#allocation4], 256
    $region41: #{tpu_custom_call.1} parent=1 // pred_fallthru
      _
    %283 = vsyncpa [#allocation3], 1
    %284 = vsyncpa [#allocation6], 1
    %285 = vsyncpa [#allocation9], 1
    %286 = vsyncpa [#allocation4], 1

</llo_original>
